<compile_context>
chip_gen: v7x
topology: tpu7x:2x2x1
jax: 0.10.0
libtpu: 0.0.40
codegen_flags: <defaults>
</compile_context>

<pallas_src>
import jax
import jax.numpy as jnp
from jax.experimental import pallas as pl
from jax.experimental.pallas import tpu as pltpu

LN_EPS = 1e-5  # Moss layer_norm_epsilon


def _round_up(x: int, m: int) -> int:
    return ((x + m - 1) // m) * m


def lmhead_kernel(x_ref, gamma_ref, beta_ref, w_ref, bias_ref, o_ref):
    # x_ref:     (tm, H)   token tile (input dtype)
    # gamma_ref: (1, H)    ln_f weight
    # beta_ref:  (1, H)    ln_f bias
    # w_ref:     (H, tn)   lm_head weight, transposed from PyTorch's [V, H]
    # bias_ref:  (1, tn)   lm_head bias tile
    # o_ref:     (tm, tn)  logits tile
    xf = x_ref[...].astype(jnp.float32)

    # LayerNorm statistics in f32 via sum / sum-of-squares (avoids a live `centered`
    # (tm, H) f32 temporary). Zero-padded token rows give mean=0, var=0 -> y=beta
    # (finite, no NaN); padded rows are sliced off in the wrapper.
    mean = jnp.mean(xf, axis=-1, keepdims=True)
    var = jnp.maximum(
        jnp.mean(jnp.square(xf), axis=-1, keepdims=True) - jnp.square(mean), 0.0
    )
    rstd = jax.lax.rsqrt(var + LN_EPS)                       # (tm, 1), EUP
    g = gamma_ref[...].astype(jnp.float32)                   # (1, H)
    b = beta_ref[...].astype(jnp.float32)                    # (1, H)
    # Fused affine: y = (x - mean) * (rstd * gamma) + beta.
    y = ((xf - mean) * (rstd * g) + b).astype(w_ref.dtype)

    # MXU matmul in the weight's (narrow) dtype with f32 accumulation: do NOT upcast W.
    # Note: if hidden_states is f32 while W is bf16, y is downcast to bf16 here.
    logits = jnp.dot(y, w_ref[...], preferred_element_type=jnp.float32)
    o_ref[...] = (logits + bias_ref[...].astype(jnp.float32)).astype(o_ref.dtype)


def _vmem_need_bytes(tm, tn, H, in_b, w_b, out_b):
    """VMEM footprint model for one grid step.

    Double-buffered pipelined blocks (x, W, bias, gamma/beta, out) PLUS the in-kernel
    f32 temporaries that the LN + matmul epilogue keep live (~3 x (tm, H) f32 and one
    (tm, tn) f32 logits tile). These temporaries dominate at large H and were the main
    source of undercounting previously.
    """
    dbuf = 2 * (tm * H * in_b + H * tn * w_b + tm * tn * out_b + 2 * H * 4 + tn * 4)
    ln_temps = 3 * tm * H * 4
    acc_f32 = tm * tn * 4
    return dbuf + ln_temps + acc_f32


def _pick_tiles(T, V, H, in_b, w_b, out_b, vmem_cap):
    """Choose (tm, tn) that fit ~65% of physical VMEM, preferring large, V-aligned tn."""
    budget = int(0.65 * vmem_cap)
    tm_max = min(256, _round_up(T, 16))          # bf16 packs 2 rows/sublane -> mult of 16
    Vp128 = _round_up(V, 128)
    tn_cands = [t for t in (4096, 2048, 1024, 512, 256, 128) if t <= Vp128] or [Vp128]
    tm_cands = []
    for t in (tm_max, 128, 64, 32, 16):
        if t <= tm_max and t not in tm_cands:
            tm_cands.append(t)

    for tm in tm_cands:
        fitting = [t for t in tn_cands if _vmem_need_bytes(tm, t, H, in_b, w_b, out_b) <= budget]
        if fitting:
            # Prefer a tn that divides round_up(V, 128): then Vp == round_up(V, 128) and
            # the post-call slice along V is a no-op (no extra T*V logits copy).
            divisors = [t for t in fitting if Vp128 % t == 0]
            return tm, (divisors[0] if divisors else fitting[0])
    return tm_cands[-1], 128  # last resort for pathological configs


def lm_head(hidden_states, ln_gamma, ln_beta, w_t, lm_bias, *, tm=None, tn=None):
    """Fused ln_f + lm_head.

    hidden_states: [B, S, H]; ln_gamma/ln_beta: [H]; w_t: [H, V] (transposed PyTorch
    Linear weight); lm_bias: [V]. Returns logits [B, S, V] in hidden_states.dtype.

    Callers should pre-pad V to a multiple of 128 (ideally 512/1024) so that neither
    the weight pad nor the output slice materializes an extra copy.
    """
    B, S, H = hidden_states.shape
    V = w_t.shape[1]
    T = B * S

    in_b = jnp.dtype(hidden_states.dtype).itemsize
    w_b = jnp.dtype(w_t.dtype).itemsize
    out_b = in_b

    # Generation-aware VMEM capacity (v5e/v6e: 128 MiB, v7x: 64 MiB per TC).
    try:
        vmem_cap = int(pltpu.get_tpu_info().vmem_capacity_bytes)
    except Exception:
        vmem_cap = 64 * 1024 * 1024  # conservative (v7x) fallback

    tm_auto, tn_auto = _pick_tiles(T, V, H, in_b, w_b, out_b, vmem_cap)
    tm = tm_auto if tm is None else min(tm, _round_up(T, 16))
    tn = tn_auto if tn is None else min(tn, _round_up(V, 128))

    Tp = _round_up(T, tm)
    Vp = _round_up(V, tn)

    x = hidden_states.reshape(T, H)
    if Tp != T:  # zero-pad tokens; padded rows sliced off below (var=0 -> y=beta, no NaN)
        x = jnp.pad(x, ((0, Tp - T), (0, 0)))
    w = w_t
    bias2 = lm_bias.reshape(1, V)
    if Vp != V:  # zero-pad vocab; padded logit columns sliced off below
        w = jnp.pad(w, ((0, 0), (0, Vp - V)))
        bias2 = jnp.pad(bias2, ((0, 0), (0, Vp - V)))
    gamma2 = ln_gamma.reshape(1, H)
    beta2 = ln_beta.reshape(1, H)

    nv, nt = Vp // tn, Tp // tm

    need = _vmem_need_bytes(tm, tn, H, in_b, w_b, out_b)
    # Headroom for Mosaic internal scratch; never above 75% of physical VMEM.
    vmem_limit = int(min(max(int(1.2 * need) + (2 << 20), 16 << 20),
                         int(0.75 * vmem_cap)))

    cost = pl.CostEstimate(
        flops=2 * T * H * V,
        transcendentals=T * nv,  # rsqrt recomputed once per resident vocab tile
        bytes_accessed=H * Vp * w_b + nv * Tp * H * in_b + Tp * Vp * out_b,
    )

    out = pl.pallas_call(
        lmhead_kernel,
        out_shape=jax.ShapeDtypeStruct((Tp, Vp), hidden_states.dtype),
        grid_spec=pltpu.PrefetchScalarGridSpec(
            num_scalar_prefetch=0,
            # Vocab OUTER (slow), tokens INNER (fast): the W tile's block index depends
            # only on the outer axis, so each [H, tn] weight tile is streamed from HBM
            # exactly once and stays resident across token tiles.
            grid=(nv, nt),
            in_specs=[
                pl.BlockSpec((tm, H), lambda j, i: (i, 0)),   # x tile (re-streamed)
                pl.BlockSpec((1, H), lambda j, i: (0, 0)),    # ln gamma
                pl.BlockSpec((1, H), lambda j, i: (0, 0)),    # ln beta
                pl.BlockSpec((H, tn), lambda j, i: (0, j)),   # W^T tile (resident over i)
                pl.BlockSpec((1, tn), lambda j, i: (0, j)),   # lm bias tile
            ],
            out_specs=pl.BlockSpec((tm, tn), lambda j, i: (i, j)),
        ),
        compiler_params=pltpu.CompilerParams(
            # Only the vocab (outer) axis is safe to shard across v7x's two TensorCores
            # without duplicating weight HBM traffic; tokens stay "arbitrary".
            dimension_semantics=("parallel", "arbitrary"),
            vmem_limit_bytes=vmem_limit,
        ),
        cost_estimate=cost,
    )(x, gamma2, beta2, w, bias2)

    if Tp != T or Vp != V:   # slice only when padding actually happened (avoid a T*V copy)
        out = out[:T, :V]
    return out.reshape(B, S, V)


def lm_head_ref(hidden_states, ln_gamma, ln_beta, w_t, lm_bias):
    x = hidden_states.astype(jnp.float32)
    mean = jnp.mean(x, axis=-1, keepdims=True)
    var = jnp.mean((x - mean) ** 2, axis=-1, keepdims=True)
    xn = (x - mean) * jax.lax.rsqrt(var + LN_EPS)
    y = xn * ln_gamma.astype(jnp.float32) + ln_beta.astype(jnp.float32)
    return y @ w_t.astype(jnp.float32) + lm_bias.astype(jnp.float32)


if __name__ == "__main__":
    # Small, deterministic synthetic shapes consistent with the module:
    # batch=2, seq=8, hidden(n_embd)=32, vocab=256. bf16 weights/activations (the
    # serving dtype); LN stats and matmul accumulation stay in f32.
    B, S, H, V = 2, 8, 32, 256
    key = jax.random.PRNGKey(0)
    k1, k2, k3, k4, k5 = jax.random.split(key, 5)

    hidden_states = jax.random.normal(k1, (B, S, H), dtype=jnp.float32).astype(jnp.bfloat16)
    ln_gamma = 1.0 + 0.1 * jax.random.normal(k2, (H,), dtype=jnp.float32)
    ln_beta = 0.1 * jax.random.normal(k3, (H,), dtype=jnp.float32)
    # PyTorch Linear weight is [V, H]; the kernel takes its transpose [H, V], bf16.
    w_t = (0.05 * jax.random.normal(k4, (H, V), dtype=jnp.float32)).astype(jnp.bfloat16)
    lm_bias = 0.01 * jax.random.normal(k5, (V,), dtype=jnp.float32)

    logits = lm_head(hidden_states, ln_gamma, ln_beta, w_t, lm_bias)
    logits = jax.block_until_ready(logits)
    assert logits.shape == (B, S, V)
    assert logits.dtype == hidden_states.dtype

    ref = lm_head_ref(hidden_states, ln_gamma, ln_beta, w_t, lm_bias)
    assert jnp.allclose(logits.astype(jnp.float32), ref, atol=5e-2, rtol=5e-2)

    # Ragged-shape sanity check (exercises the T/V zero-padding + slice path).
    B2, S2, V2 = 2, 7, 200
    h2 = jax.random.normal(k1, (B2, S2, H), dtype=jnp.float32).astype(jnp.bfloat16)
    w2 = (0.05 * jax.random.normal(k4, (H, V2), dtype=jnp.float32)).astype(jnp.bfloat16)
    b2 = 0.01 * jax.random.normal(k5, (V2,), dtype=jnp.float32)
    logits2 = jax.block_until_ready(lm_head(h2, ln_gamma, ln_beta, w2, b2))
    ref2 = lm_head_ref(h2, ln_gamma, ln_beta, w2, b2)
    assert logits2.shape == (B2, S2, V2)
    assert jnp.allclose(logits2.astype(jnp.float32), ref2, atol=5e-2, rtol=5e-2)

    print("KERNEL_OK")
</pallas_src>

<mosaic_0001>
module attributes {stable_mosaic.version = 11 : i64} {
  func.func @lmhead_kernel(%arg0: i32, %arg1: i32, %arg2: memref<16x32xbf16, #tpu.memory_space<vmem>>, %arg3: memref<1x32xf32, #tpu.memory_space<vmem>>, %arg4: memref<1x32xf32, #tpu.memory_space<vmem>>, %arg5: memref<32x256xbf16, #tpu.memory_space<vmem>>, %arg6: memref<1x256xf32, #tpu.memory_space<vmem>>, %arg7: memref<16x256xbf16, #tpu.memory_space<vmem>>) attributes {dimension_semantics = [#tpu.dimension_semantics<parallel>, #tpu.dimension_semantics<arbitrary>], iteration_bounds = array<i64: 1, 1>, scalar_prefetch = 0 : i64, scratch_operands = 0 : i64, tpu.core_type = #tpu.core_type<tc>, window_params = [{transform_indices = @transform_0, window_bounds = array<i64: 16, 32>}, {pipeline_mode = #tpu.pipeline_mode<synchronous>, transform_indices = @transform_1, window_bounds = array<i64: 1, 32>}, {pipeline_mode = #tpu.pipeline_mode<synchronous>, transform_indices = @transform_2, window_bounds = array<i64: 1, 32>}, {transform_indices = @transform_3, window_bounds = array<i64: 32, 256>}, {transform_indices = @transform_4, window_bounds = array<i64: 1, 256>}, {transform_indices = @transform_5, window_bounds = array<i64: 16, 256>}]} {
    %c0 = arith.constant 0 : index
    %c0_0 = arith.constant 0 : index
    %0 = vector.load %arg2[%c0, %c0_0] : memref<16x32xbf16, #tpu.memory_space<vmem>>, vector<16x32xbf16>
    %1 = arith.extf %0 : vector<16x32xbf16> to vector<16x32xf32>
    %cst = arith.constant dense<0.000000e+00> : vector<16xf32>
    %2 = vector.multi_reduction <add>, %1, %cst [1] : vector<16x32xf32> to vector<16xf32>
    %3 = vector.shape_cast %2 : vector<16xf32> to vector<16x1xf32>
    %cst_1 = arith.constant 3.200000e+01 : f32
    %4 = vector.broadcast %cst_1 : f32 to vector<16x1xf32>
    %5 = arith.divf %3, %4 : vector<16x1xf32>
    %6 = arith.mulf %1, %1 : vector<16x32xf32>
    %cst_2 = arith.constant dense<0.000000e+00> : vector<16xf32>
    %7 = vector.multi_reduction <add>, %6, %cst_2 [1] : vector<16x32xf32> to vector<16xf32>
    %8 = vector.shape_cast %7 : vector<16xf32> to vector<16x1xf32>
    %cst_3 = arith.constant 3.200000e+01 : f32
    %9 = vector.broadcast %cst_3 : f32 to vector<16x1xf32>
    %10 = arith.divf %8, %9 : vector<16x1xf32>
    %11 = arith.mulf %5, %5 : vector<16x1xf32>
    %12 = arith.subf %10, %11 : vector<16x1xf32>
    %cst_4 = arith.constant 0.000000e+00 : f32
    %13 = vector.broadcast %cst_4 : f32 to vector<16x1xf32>
    %14 = arith.maximumf %12, %13 : vector<16x1xf32>
    %cst_5 = arith.constant 9.99999974E-6 : f32
    %15 = vector.broadcast %cst_5 : f32 to vector<16x1xf32>
    %16 = arith.addf %14, %15 : vector<16x1xf32>
    %17 = math.rsqrt %16 : vector<16x1xf32>
    %c0_6 = arith.constant 0 : index
    %c0_7 = arith.constant 0 : index
    %18 = vector.load %arg3[%c0_6, %c0_7] : memref<1x32xf32, #tpu.memory_space<vmem>>, vector<1x32xf32>
    %c0_8 = arith.constant 0 : index
    %c0_9 = arith.constant 0 : index
    %19 = vector.load %arg4[%c0_8, %c0_9] : memref<1x32xf32, #tpu.memory_space<vmem>>, vector<1x32xf32>
    %20 = vector.broadcast %5 : vector<16x1xf32> to vector<16x32xf32>
    %21 = arith.subf %1, %20 : vector<16x32xf32>
    %22 = vector.broadcast %17 : vector<16x1xf32> to vector<16x32xf32>
    %23 = vector.broadcast %18 : vector<1x32xf32> to vector<16x32xf32>
    %24 = arith.mulf %22, %23 : vector<16x32xf32>
    %25 = arith.mulf %21, %24 : vector<16x32xf32>
    %26 = vector.broadcast %19 : vector<1x32xf32> to vector<16x32xf32>
    %27 = arith.addf %25, %26 : vector<16x32xf32>
    %28 = arith.truncf %27 : vector<16x32xf32> to vector<16x32xbf16>
    %c0_10 = arith.constant 0 : index
    %c0_11 = arith.constant 0 : index
    %29 = vector.load %arg5[%c0_10, %c0_11] : memref<32x256xbf16, #tpu.memory_space<vmem>>, vector<32x256xbf16>
    %cst_12 = arith.constant dense<0.000000e+00> : vector<16x256xf32>
    %30 = tpu.matmul %28, %29, %cst_12 {dimension_numbers = #tpu.dot_dimension_numbers<[1], [0], [0], [1], [0, 0, 1, 1], [], []>} : vector<16x32xbf16>, vector<32x256xbf16>, vector<16x256xf32> -> vector<16x256xf32>
    %c0_13 = arith.constant 0 : index
    %c0_14 = arith.constant 0 : index
    %31 = vector.load %arg6[%c0_13, %c0_14] : memref<1x256xf32, #tpu.memory_space<vmem>>, vector<1x256xf32>
    %32 = vector.broadcast %31 : vector<1x256xf32> to vector<16x256xf32>
    %33 = arith.addf %30, %32 : vector<16x256xf32>
    %34 = arith.truncf %33 : vector<16x256xf32> to vector<16x256xbf16>
    %c0_15 = arith.constant 0 : index
    %c0_16 = arith.constant 0 : index
    %35 = vector.load %arg7[%c0_15, %c0_16] : memref<16x256xbf16, #tpu.memory_space<vmem>>, vector<16x256xbf16>
    tpu.vector_store %arg7[%c0_15, %c0_16], %34 {strides = array<i32>} : memref<16x256xbf16, #tpu.memory_space<vmem>>, vector<16x256xbf16>,
    return
  }
  func.func @transform_0(%arg0: i32, %arg1: i32) -> (i32, i32) {
    %c0_i32 = arith.constant 0 : i32
    %c0_i32_0 = arith.constant 0 : i32
    return %arg1, %c0_i32 : i32, i32
  }
  func.func @transform_1(%arg0: i32, %arg1: i32) -> (i32, i32) {
    %c0_i32 = arith.constant 0 : i32
    %c0_i32_0 = arith.constant 0 : i32
    %c0_i32_1 = arith.constant 0 : i32
    return %c0_i32, %c0_i32_0 : i32, i32
  }
  func.func @transform_2(%arg0: i32, %arg1: i32) -> (i32, i32) {
    %c0_i32 = arith.constant 0 : i32
    %c0_i32_0 = arith.constant 0 : i32
    %c0_i32_1 = arith.constant 0 : i32
    return %c0_i32, %c0_i32_0 : i32, i32
  }
  func.func @transform_3(%arg0: i32, %arg1: i32) -> (i32, i32) {
    %c0_i32 = arith.constant 0 : i32
    %c0_i32_0 = arith.constant 0 : i32
    return %c0_i32, %arg0 : i32, i32
  }
  func.func @transform_4(%arg0: i32, %arg1: i32) -> (i32, i32) {
    %c0_i32 = arith.constant 0 : i32
    %c0_i32_0 = arith.constant 0 : i32
    return %c0_i32, %arg0 : i32, i32
  }
  func.func @transform_5(%arg0: i32, %arg1: i32) -> (i32, i32) {
    %c0_i32 = arith.constant 0 : i32
    return %arg1, %arg0 : i32, i32
  }
}

</mosaic_0001>

<llo_original>
// kernel: tpu_custom_call.1
$region0: #{tpu_custom_call.1}
  #allocation0 [shape = 'u32[]', space=smem, size = 0x4, offset = 0x4, fixed_abs, tag = 'smem constant byte address 0x4 - core index']
  #allocation1 [shape = 'u32[144,128]{1,0:T(1,128)}', space=vmem, size = 0x12000, scoped, tag = 'internal scratch']
  %s0 = inlined_call_operand.hbm [shape: bf16[16,32], index: 0, kind: input, shape index: {}]
  %s1 = inlined_call_operand.vmem [shape: f32[1,32], index: 1, kind: input, shape index: {}]
  %s2 = inlined_call_operand.vmem [shape: f32[1,32], index: 2, kind: input, shape index: {}]
  %s3 = inlined_call_operand.hbm [shape: bf16[32,256], index: 3, kind: input, shape index: {}]
  %s4 = inlined_call_operand.vmem [shape: f32[1,256], index: 4, kind: input, shape index: {}]
  %s5 = inlined_call_operand.hbm [shape: bf16[16,256], index: 5, kind: output, shape index: {}]
  %s6 = sld [smem:[#allocation0]]
  $region38: #{tpu_custom_call.1} parent=0
    _
  %s8 = ssub.s32 1, %s6
  %s9 = scalar_select 0, %s8, %s6
  $region1: #{tpu_custom_call.1} parent=0
    #allocation2 [shape = 'u8[4096]{0}', space=vmem, size = 0x1000, scoped, tag = 'input window, operand 0, single buffered']
    #allocation3 [shape = 's32[1]{0}', space=sflag, size = 0x4, scoped, tag = 'scoped memory for tpu_custom_call.1']
    #allocation4 [shape = 's32[1]{0}', space=sflag, size = 0x4, scoped, tag = 'scoped memory for tpu_custom_call.1']
    #allocation5 [shape = 'u8[16384]{0}', space=vmem, size = 0x4000, scoped, tag = 'input window, operand 3, single buffered']
    #allocation6 [shape = 's32[1]{0}', space=sflag, size = 0x4, scoped, tag = 'scoped memory for tpu_custom_call.1']
    #allocation7 [shape = 'u8[8192]{0}', space=vmem, size = 0x2000, scoped, tag = 'output window, operand 0, single buffered']
    %10 = vsyncpa [#allocation3], 0
    %11 = vsyncpa [#allocation6], 0
    %12 = vsyncpa [#allocation4], 0
    // Predicated region
    $region2: #{tpu_custom_call.1} parent=1 // pred_check
      _
    $region3: #{tpu_custom_call.1} parent=1 // pred_check_branch
      %14 = sbr.rel (0) target = $region5
    $region4: #{tpu_custom_call.1} parent=1 // pred_region
      %s16 = ssub.s32 128, 128
      %17 = vsyncadd [#allocation3], %s16
      %s18 = sshll.u32 [#allocation2], 4
      %s19 = int_to_ptr.vmem [resolvable:$true] %s18
      %24 = dma.hbm_to_vmem [thread:$0]  %s0, 128, %s19, [#allocation3], 64, 64, 4
    $region5: #{tpu_custom_call.1} parent=1 // pred_fallthru
      _
    // Predicated region
    $region6: #{tpu_custom_call.1} parent=1 // pred_check
      _
    $region7: #{tpu_custom_call.1} parent=1 // pred_check_branch
      %26 = sbr.rel (0) target = $region9
    $region8: #{tpu_custom_call.1} parent=1 // pred_region
      _
    $region9: #{tpu_custom_call.1} parent=1 // pred_fallthru
      _
    // Predicated region
    $region10: #{tpu_custom_call.1} parent=1 // pred_check
      _
    $region11: #{tpu_custom_call.1} parent=1 // pred_check_branch
      %28 = sbr.rel (0) target = $region13
    $region12: #{tpu_custom_call.1} parent=1 // pred_region
      _
    $region13: #{tpu_custom_call.1} parent=1 // pred_fallthru
      _
    // Predicated region
    $region14: #{tpu_custom_call.1} parent=1 // pred_check
      _
    $region15: #{tpu_custom_call.1} parent=1 // pred_check_branch
      %30 = sbr.rel (0) target = $region17
    $region16: #{tpu_custom_call.1} parent=1 // pred_region
      %s32 = ssub.s32 512, 512
      %33 = vsyncadd [#allocation6], %s32
      %s34 = sshll.u32 [#allocation5], 4
      %s35 = int_to_ptr.vmem [resolvable:$true] %s34
      %40 = dma.hbm_to_vmem [thread:$0]  %s3, 512, %s35, [#allocation6], 128, 128, 8
    $region17: #{tpu_custom_call.1} parent=1 // pred_fallthru
      _
    // Predicated region
    $region18: #{tpu_custom_call.1} parent=1 // pred_check
      _
    $region19: #{tpu_custom_call.1} parent=1 // pred_check_branch
      %42 = sbr.rel (0) target = $region21
    $region20: #{tpu_custom_call.1} parent=1 // pred_region
      _
    $region21: #{tpu_custom_call.1} parent=1 // pred_fallthru
      _
    // Predicated region
    $region22: #{tpu_custom_call.1} parent=1 // pred_check
      _
    $region23: #{tpu_custom_call.1} parent=1 // pred_check_branch
      %44 = sbr.rel (0) target = $region25
    $region24: #{tpu_custom_call.1} parent=1 // pred_region
      %45 = dma.done [#allocation3], 128
    $region25: #{tpu_custom_call.1} parent=1 // pred_fallthru
      _
    // Predicated region
    $region26: #{tpu_custom_call.1} parent=1 // pred_check
      _
    $region27: #{tpu_custom_call.1} parent=1 // pred_check_branch
      %47 = sbr.rel (0) target = $region29
    $region28: #{tpu_custom_call.1} parent=1 // pred_region
      %48 = dma.done [#allocation6], 512
    $region29: #{tpu_custom_call.1} parent=1 // pred_fallthru
      _
    %v50 = vld [vmem:[#allocation2] sm:$0xf]
    %v51 = vld [vmem:[#allocation2 + $0x4] sm:$0xf]
    %v52 = vunpack.c.l.bf16 %v50
    %v53 = vunpack.c.l.bf16 %v51
    %vm54 = vcmask 261120
    %v55 = vsel %vm54, %v52, 0.0
    %56 = vadd.xlane.f32.xlu0 %v55
    %v57 = vpop.xlane.xlu0 %56
    %v58 = vsel %vm54, %v53, 0.0
    %59 = vadd.xlane.f32.xlu0 %v58
    %v60 = vpop.xlane.xlu0 %59
    %v61 = vrcp.pop 32.0
    %v62 = vmul.f32 %v57, %v61
    %v63 = vmul.f32 %v60, %v61
    %v64 = vmul.f32 %v52, %v52
    %v65 = vmul.f32 %v53, %v53
    %v66 = vsel %vm54, %v64, 0.0
    %67 = vadd.xlane.f32.xlu0 %v66
    %v68 = vpop.xlane.xlu0 %67
    %v69 = vsel %vm54, %v65, 0.0
    %70 = vadd.xlane.f32.xlu0 %v69
    %v71 = vpop.xlane.xlu0 %70
    %v72 = vmul.f32 %v68, %v61
    %v73 = vmul.f32 %v71, %v61
    %v74 = vmul.f32 %v62, %v62
    %v75 = vmul.f32 %v63, %v63
    %v76 = vsub.f32 %v72, %v74
    %v77 = vsub.f32 %v73, %v75
    %v78 = vmax.f32 %v76, 0.0
    %v79 = vmax.f32 %v77, 0.0
    %v80 = vadd.f32 %v78, 1e-05
    %v81 = vadd.f32 %v79, 1e-05
    %v82 = vrsqrt.pop %v80
    %v83 = vrsqrt.pop %v81
    %v84 = vld [vmem:[%s1] sm:$0x1]
    %v85 = vld [vmem:[%s2] sm:$0x1]
    %v86 = vsub.f32 %v52, %v62
    %v87 = vsub.f32 %v53, %v63
    %v89 = vlaneseq
    %v90 = vshrl.u32 %v89, 7
    %v91 = vsub.s32 0, %v90
    %v92 = vrot.slane %v84, %v91
    %v94 = vmul.f32 %v82, %v92
    %v95 = vmul.f32 %v83, %v92
    %v96 = vmul.f32 %v86, %v94
    %v97 = vmul.f32 %v87, %v95
    %v99 = vlaneseq
    %v100 = vshrl.u32 %v99, 7
    %v101 = vsub.s32 0, %v100
    %v102 = vrot.slane %v85, %v101
    %v104 = vadd.f32 %v96, %v102
    %v105 = vadd.f32 %v97, %v102
    %v106 = vpack.c.bf16 %v105, %v104
    %v107 = vld [vmem:[#allocation5] sm:$0xff]
    %v108 = vld [vmem:[#allocation5 + $0x8] sm:$0xff]
    %v109 = vld [vmem:[#allocation5 + $0x10] sm:$0xff]
    %v110 = vld [vmem:[#allocation5 + $0x18] sm:$0xff]
    %v111 = vld [vmem:[%s4] sm:$0x3]
    %v113 = vlaneseq
    %v114 = vshrl.u32 %v113, 7
    %v115 = vsub.s32 0, %v114
    %v116 = vrot.slane %v111, %v115
    %v117 = vlaneseq
    %v118 = vshrl.u32 %v117, 7
    %v119 = vsub.s32 1, %v118
    %v120 = vrot.slane %v111, %v119
    %v127 = vunpack.c.l.b16 %v107
    %v128 = vunpack.c.h.b16 %v107
    %v129 = vunpack.c.l.b16 %v108
    %v130 = vunpack.c.h.b16 %v108
    %v131 = vunpack.c.l.b16 %v109
    %v132 = vunpack.c.h.b16 %v109
    %v133 = vunpack.c.l.b16 %v110
    %v134 = vunpack.c.h.b16 %v110
    %v135 = vpack.c.b16 %v129, %v127
    %v136 = vpack.c.b16 %v130, %v128
    %v137 = vpack.c.b16 %v133, %v131
    %v138 = vpack.c.b16 %v134, %v132
    %v144 = vsel %vm54, %v106, 0
    %146 = vmatprep.subr.bf16.mxu0 %v136
    %147 = vmatpush1.bf16.msra.mxu0 %v135
    %148 = vmatprep.subr.bf16.mxu0 %v138
    %149 = vmatpush1.bf16.msra.mxu0 %v137
    %150 = vmatprep.subr.bf16.mxu0 0
    %151 = vmatpush1.bf16.msra.mxu0 0
    %152 = vmatprep.subr.bf16.mxu0 0
    %153 = vmatpush1.bf16.msra.mxu0 0
    %154 = vmatprep.subr.bf16.mxu0 0
    %155 = vmatpush1.bf16.msra.mxu0 0
    %156 = vmatprep.subr.bf16.mxu0 0
    %157 = vmatpush1.bf16.msra.mxu0 0
    %158 = vmatprep.subr.bf16.mxu0 0
    %159 = vmatpush1.bf16.msra.mxu0 0
    %160 = vmatprep.subr.bf16.mxu0 0
    %161 = vmatpush1.bf16.msra.mxu0 0
    %162 = vmatprep.subr.bf16.mxu0 0
    %163 = vmatpush1.bf16.msra.mxu0 0
    %164 = vmatprep.subr.bf16.mxu0 0
    %165 = vmatpush1.bf16.msra.mxu0 0
    %166 = vmatprep.subr.bf16.mxu0 0
    %167 = vmatpush1.bf16.msra.mxu0 0
    %168 = vmatprep.subr.bf16.mxu0 0
    %169 = vmatpush1.bf16.msra.mxu0 0
    %170 = vmatprep.subr.bf16.mxu0 0
    %171 = vmatpush1.bf16.msra.mxu0 0
    %172 = vmatprep.subr.bf16.mxu0 0
    %173 = vmatpush1.bf16.msra.mxu0 0
    %174 = vmatprep.subr.bf16.mxu0 0
    %175 = vmatpush1.bf16.msra.mxu0 0
    %176 = vmatprep.subr.bf16.mxu0 0
    %177 = vmatpush1.bf16.msra.mxu0 0
    %178 = vmatprep.mubr.bf16.mxu0 0
    %179 = vmatmul.mubr.bf16.gmra.mrb[0].mxu0 %v144
    %v180 = vpop.f32.mrb[0].mxu0
    %v181 = vadd.f32 %v116, %v180
    %v182 = vpop.f32.mrb[0].mxu0
    %v183 = vadd.f32 %v120, %v182
    %v184 = vpop.f32.mrb[0].mxu0
    %v185 = vadd.f32 %v116, %v184
    %v186 = vpop.f32.mrb[0].mxu0
    %v187 = vadd.f32 %v120, %v186
    %188 = vdwg.mxu0
    %v189 = vpack.c.bf16 %v185, %v181
    %v190 = vpack.c.bf16 %v187, %v183
    %v193 = vunpack.c.l.b16 %v189
    %v194 = vunpack.c.l.b16 %v190
    %v195 = vunpack.c.h.b16 %v189
    %v196 = vunpack.c.h.b16 %v190
    %v197 = vpack.c.b16 %v194, %v193
    %v198 = vpack.c.b16 %v196, %v195
    %201 = vst [vmem:[#allocation7] sm:$0xff] %v197
    %202 = vst [vmem:[#allocation7 + $0x8] sm:$0xff] %v198
    // Predicated region
    $region30: #{tpu_custom_call.1} parent=1 // pred_check
      _
    $region31: #{tpu_custom_call.1} parent=1 // pred_check_branch
      %204 = sbr.rel (0) target = $region33
    $region32: #{tpu_custom_call.1} parent=1 // pred_region
      %s206 = ssub.s32 256, 256
      %207 = vsyncadd [#allocation4], %s206
      %s208 = sshll.u32 [#allocation7], 4
      %s209 = int_to_ptr.vmem [resolvable:$true] %s208
      %214 = dma.vmem_to_hbm [thread:$0]  %s209, 256, %s5, [#allocation4], 128, 128, 8
    $region33: #{tpu_custom_call.1} parent=1 // pred_fallthru
      _
    // Predicated region
    $region34: #{tpu_custom_call.1} parent=1 // pred_check
      _
    $region35: #{tpu_custom_call.1} parent=1 // pred_check_branch
      %216 = sbr.rel (0) target = $region37
    $region36: #{tpu_custom_call.1} parent=1 // pred_region
      %217 = dma.done [#allocation4], 256
    $region37: #{tpu_custom_call.1} parent=1 // pred_fallthru
      _
    %218 = vsyncpa [#allocation3], 1
    %219 = vsyncpa [#allocation6], 1
    %220 = vsyncpa [#allocation4], 1

</llo_original>
